<compile_context>
chip_gen: v7x
topology: tpu7x:2x2x1
jax: 0.10.0
libtpu: 0.0.40
codegen_flags: <defaults>
</compile_context>

<pallas_src>
import functools

import numpy as np

import jax
import jax.numpy as jnp
from jax import lax
from jax.experimental import pallas as pl
from jax.experimental.pallas import tpu as pltpu


def _reflect_box_matrix(n, radius):
    """B[m, j] = #{k in [-r, r] : reflect(j + k) == m} (torch ReflectionPad
    indexing).  Then (x @ B)[:, j] is the reflect-padded box SUM along that
    axis.  Requires radius <= n - 1 (same constraint as ReflectionPad2d)."""
    assert radius <= n - 1, "reflection pad requires radius <= dim - 1"
    B = np.zeros((n, n), np.float32)
    for j in range(n):
        for k in range(-radius, radius + 1):
            m = j + k
            if m < 0:
                m = -m
            elif m >= n:
                m = 2 * (n - 1) - m
            B[m, j] += 1.0
    return B


def _lcn_kernel(x_ref, bh_ref, bw_ref, img_ref, std_ref, *, inv_k2, epsilon):
    x = x_ref[0]      # (H, L) float32, L = Nb*W lane-packed images
    bh = bh_ref[...]  # (H, H) reflect-box matrix, H direction
    bw = bw_ref[...]  # (L, L) block-diagonal reflect-box matrix, W direction

    # avg = box(reflect_pad(x)) / K^2 ; both box sums run on the MXU.
    avg = jnp.dot(bh, jnp.dot(x, bw, preferred_element_type=jnp.float32),
                  preferred_element_type=jnp.float32) * inv_k2
    diff = x - avg
    std2 = jnp.dot(bh, jnp.dot(diff * diff, bw,
                               preferred_element_type=jnp.float32),
                   preferred_element_type=jnp.float32) * inv_k2
    std = jnp.sqrt(std2)
    img_ref[0] = diff / (std + epsilon)
    std_ref[0] = std


def lcn_forward(data, radius, epsilon, *, lane_target=128):
    """data: (N, 1, H, W) -> (img, std), both (N, 1, H, W) float32."""
    N, C, H, W = data.shape
    assert C == 1, "LCN conv is Conv2d(1, 1, ...): channel dim must be 1"
    r = int(radius)
    K = 2 * r + 1

    # Images per block: make the packed lane width ~lane_target (lane-dense
    # stores), but keep >= 2 grid steps when N allows (v7x: 2 TensorCores).
    nb = max(1, min(pl.cdiv(lane_target, W), N))
    if pl.cdiv(N, nb) < 2 and N > 1:
        nb = pl.cdiv(N, 2)
    G = pl.cdiv(N, nb)
    Np = G * nb
    L = nb * W

    x = data[:, 0].astype(jnp.float32)                         # (N, H, W)
    if Np != N:  # pad with zero images (img=0, std=0; sliced off at the end)
        x = jnp.concatenate([x, jnp.zeros((Np - N, H, W), jnp.float32)], 0)
    # Wrapper-side lane packing (layout plumbing only): (G, H, nb*W)
    xp = x.reshape(G, nb, H, W).transpose(0, 2, 1, 3).reshape(G, H, L)

    # Static reflect-padded-box-filter matrices (built once at trace time).
    bh = jnp.asarray(_reflect_box_matrix(H, r).T)                       # (H, H)
    bw = jnp.asarray(np.kron(np.eye(nb, dtype=np.float32),
                             _reflect_box_matrix(W, r)))                # (L, L)

    kernel = functools.partial(_lcn_kernel, inv_k2=1.0 / float(K * K),
                               epsilon=float(epsilon))
    img_p, std_p = pl.pallas_call(
        kernel,
        out_shape=(jax.ShapeDtypeStruct((G, H, L), jnp.float32),
                   jax.ShapeDtypeStruct((G, H, L), jnp.float32)),
        grid=(G,),
        in_specs=[
            pl.BlockSpec((1, H, L), lambda g: (g, 0, 0)),
            pl.BlockSpec((H, H), lambda g: (0, 0)),  # constant block: stays resident
            pl.BlockSpec((L, L), lambda g: (0, 0)),  # constant block: stays resident
        ],
        out_specs=(
            pl.BlockSpec((1, H, L), lambda g: (g, 0, 0)),
            pl.BlockSpec((1, H, L), lambda g: (g, 0, 0)),
        ),
        compiler_params=pltpu.CompilerParams(
            dimension_semantics=("parallel",)),
    )(xp, bh, bw)

    def unpack(y):
        y = y.reshape(G, H, nb, W).transpose(0, 2, 1, 3).reshape(Np, H, W)
        return y[:N, None]                                     # back to NCHW

    return unpack(img_p), unpack(std_p)


def _reference_lcn(data, radius, epsilon):
    """Pure-JAX reference mirroring the PyTorch module (for verification)."""
    r = radius
    K = 2 * r + 1
    w = jnp.full((1, 1, K, K), 1.0 / (K * K), jnp.float32)     # OIHW, fill_(1/pix)

    def box(x_nchw):
        xq = jnp.pad(x_nchw, ((0, 0), (0, 0), (r, r), (r, r)), mode="reflect")
        return lax.conv_general_dilated(
            xq, w, window_strides=(1, 1), padding="VALID",
            dimension_numbers=("NCHW", "OIHW", "NCHW"))

    avg = box(data)
    diff = data - avg
    std = jnp.sqrt(box(diff * diff))
    img = (data - avg) / (std + epsilon)
    return img, std


if __name__ == "__main__":
    radius = 2
    epsilon = 1e-6
    key = jax.random.PRNGKey(0)

    # Two shapes: small demo (2 grid steps, v7x-friendly) and a batch that
    # exercises the lane-dense packing (nb=8 -> 128 lanes) with zero padding.
    for shape in [(2, 1, 16, 16), (13, 1, 16, 16)]:
        key, sub = jax.random.split(key)
        data = jax.random.normal(sub, shape, dtype=jnp.float32)

        img, std = jax.block_until_ready(lcn_forward(data, radius, epsilon))

        ref_img, ref_std = _reference_lcn(data, radius, epsilon)
        assert img.shape == shape and std.shape == shape
        assert jnp.allclose(img, ref_img, atol=1e-4, rtol=1e-4)
        assert jnp.allclose(std, ref_std, atol=1e-5, rtol=1e-4)

    print("KERNEL_OK")
</pallas_src>

<mosaic_0001>
module attributes {stable_mosaic.version = 11 : i64} {
  func.func @_lcn_kernel(%arg0: i32, %arg1: memref<1x16x16xf32, #tpu.memory_space<vmem>>, %arg2: memref<16x16xf32, #tpu.memory_space<vmem>>, %arg3: memref<16x16xf32, #tpu.memory_space<vmem>>, %arg4: memref<1x16x16xf32, #tpu.memory_space<vmem>>, %arg5: memref<1x16x16xf32, #tpu.memory_space<vmem>>) attributes {dimension_semantics = [#tpu.dimension_semantics<parallel>], iteration_bounds = array<i64: 2>, scalar_prefetch = 0 : i64, scratch_operands = 0 : i64, tpu.core_type = #tpu.core_type<tc>, window_params = [{transform_indices = @transform_0, window_bounds = array<i64: 1, 16, 16>}, {pipeline_mode = #tpu.pipeline_mode<synchronous>, transform_indices = @transform_1, window_bounds = array<i64: 16, 16>}, {pipeline_mode = #tpu.pipeline_mode<synchronous>, transform_indices = @transform_2, window_bounds = array<i64: 16, 16>}, {transform_indices = @transform_3, window_bounds = array<i64: 1, 16, 16>}, {transform_indices = @transform_4, window_bounds = array<i64: 1, 16, 16>}]} {
    %c0 = arith.constant 0 : index
    %c0_0 = arith.constant 0 : index
    %c0_1 = arith.constant 0 : index
    %0 = vector.load %arg1[%c0, %c0_0, %c0_1] : memref<1x16x16xf32, #tpu.memory_space<vmem>>, vector<1x16x16xf32>
    %1 = vector.shape_cast %0 : vector<1x16x16xf32> to vector<16x16xf32>
    %c0_2 = arith.constant 0 : index
    %c0_3 = arith.constant 0 : index
    %2 = vector.load %arg2[%c0_2, %c0_3] : memref<16x16xf32, #tpu.memory_space<vmem>>, vector<16x16xf32>
    %c0_4 = arith.constant 0 : index
    %c0_5 = arith.constant 0 : index
    %3 = vector.load %arg3[%c0_4, %c0_5] : memref<16x16xf32, #tpu.memory_space<vmem>>, vector<16x16xf32>
    %cst = arith.constant dense<0.000000e+00> : vector<16x16xf32>
    %4 = tpu.matmul %1, %3, %cst {dimension_numbers = #tpu.dot_dimension_numbers<[1], [0], [0], [1], [0, 0, 1, 1], [], []>} : vector<16x16xf32>, vector<16x16xf32>, vector<16x16xf32> -> vector<16x16xf32>
    %cst_6 = arith.constant dense<0.000000e+00> : vector<16x16xf32>
    %5 = tpu.matmul %2, %4, %cst_6 {dimension_numbers = #tpu.dot_dimension_numbers<[1], [0], [0], [1], [0, 0, 1, 1], [], []>} : vector<16x16xf32>, vector<16x16xf32>, vector<16x16xf32> -> vector<16x16xf32>
    %cst_7 = arith.constant 4.000000e-02 : f32
    %6 = vector.broadcast %cst_7 : f32 to vector<16x16xf32>
    %7 = arith.mulf %5, %6 : vector<16x16xf32>
    %8 = arith.subf %1, %7 : vector<16x16xf32>
    %9 = arith.mulf %8, %8 : vector<16x16xf32>
    %cst_8 = arith.constant dense<0.000000e+00> : vector<16x16xf32>
    %10 = tpu.matmul %9, %3, %cst_8 {dimension_numbers = #tpu.dot_dimension_numbers<[1], [0], [0], [1], [0, 0, 1, 1], [], []>} : vector<16x16xf32>, vector<16x16xf32>, vector<16x16xf32> -> vector<16x16xf32>
    %cst_9 = arith.constant dense<0.000000e+00> : vector<16x16xf32>
    %11 = tpu.matmul %2, %10, %cst_9 {dimension_numbers = #tpu.dot_dimension_numbers<[1], [0], [0], [1], [0, 0, 1, 1], [], []>} : vector<16x16xf32>, vector<16x16xf32>, vector<16x16xf32> -> vector<16x16xf32>
    %cst_10 = arith.constant 4.000000e-02 : f32
    %12 = vector.broadcast %cst_10 : f32 to vector<16x16xf32>
    %13 = arith.mulf %11, %12 : vector<16x16xf32>
    %14 = math.sqrt %13 : vector<16x16xf32>
    %cst_11 = arith.constant 9.99999997E-7 : f32
    %15 = vector.broadcast %cst_11 : f32 to vector<16x16xf32>
    %16 = arith.addf %14, %15 : vector<16x16xf32>
    %17 = arith.divf %8, %16 : vector<16x16xf32>
    %c0_12 = arith.constant 0 : index
    %c0_13 = arith.constant 0 : index
    %c0_14 = arith.constant 0 : index
    %18 = vector.load %arg4[%c0_12, %c0_13, %c0_14] : memref<1x16x16xf32, #tpu.memory_space<vmem>>, vector<1x16x16xf32>
    %19 = vector.shape_cast %18 : vector<1x16x16xf32> to vector<16x16xf32>
    %20 = vector.shape_cast %17 : vector<16x16xf32> to vector<1x16x16xf32>
    tpu.vector_store %arg4[%c0_12, %c0_13, %c0_14], %20 {strides = array<i32>} : memref<1x16x16xf32, #tpu.memory_space<vmem>>, vector<1x16x16xf32>,
    %c0_15 = arith.constant 0 : index
    %c0_16 = arith.constant 0 : index
    %c0_17 = arith.constant 0 : index
    %21 = vector.load %arg5[%c0_15, %c0_16, %c0_17] : memref<1x16x16xf32, #tpu.memory_space<vmem>>, vector<1x16x16xf32>
    %22 = vector.shape_cast %21 : vector<1x16x16xf32> to vector<16x16xf32>
    %23 = vector.shape_cast %14 : vector<16x16xf32> to vector<1x16x16xf32>
    tpu.vector_store %arg5[%c0_15, %c0_16, %c0_17], %23 {strides = array<i32>} : memref<1x16x16xf32, #tpu.memory_space<vmem>>, vector<1x16x16xf32>,
    return
  }
  func.func @transform_0(%arg0: i32) -> (i32, i32, i32) {
    %c0_i32 = arith.constant 0 : i32
    %c0_i32_0 = arith.constant 0 : i32
    %c0_i32_1 = arith.constant 0 : i32
    return %arg0, %c0_i32, %c0_i32_0 : i32, i32, i32
  }
  func.func @transform_1(%arg0: i32) -> (i32, i32) {
    %c0_i32 = arith.constant 0 : i32
    %c0_i32_0 = arith.constant 0 : i32
    %c0_i32_1 = arith.constant 0 : i32
    return %c0_i32, %c0_i32_0 : i32, i32
  }
  func.func @transform_2(%arg0: i32) -> (i32, i32) {
    %c0_i32 = arith.constant 0 : i32
    %c0_i32_0 = arith.constant 0 : i32
    %c0_i32_1 = arith.constant 0 : i32
    return %c0_i32, %c0_i32_0 : i32, i32
  }
  func.func @transform_3(%arg0: i32) -> (i32, i32, i32) {
    %c0_i32 = arith.constant 0 : i32
    %c0_i32_0 = arith.constant 0 : i32
    %c0_i32_1 = arith.constant 0 : i32
    return %arg0, %c0_i32, %c0_i32_0 : i32, i32, i32
  }
  func.func @transform_4(%arg0: i32) -> (i32, i32, i32) {
    %c0_i32 = arith.constant 0 : i32
    %c0_i32_0 = arith.constant 0 : i32
    %c0_i32_1 = arith.constant 0 : i32
    return %arg0, %c0_i32, %c0_i32_0 : i32, i32, i32
  }
}

</mosaic_0001>

<llo_original>
// kernel: tpu_custom_call.1
$region0: #{tpu_custom_call.1}
  #allocation0 [shape = 'u32[]', space=smem, size = 0x4, offset = 0x4, fixed_abs, tag = 'smem constant byte address 0x4 - core index']
  #allocation1 [shape = 'u32[144,128]{1,0:T(1,128)}', space=vmem, size = 0x12000, scoped, tag = 'internal scratch']
  %s0 = inlined_call_operand.hbm [shape: f32[2,16,16], index: 0, kind: input, shape index: {}]
  %s1 = inlined_call_operand.hbm [shape: f32[16,16], index: 1, kind: input, shape index: {}]
  %s2 = inlined_call_operand.hbm [shape: f32[16,16], index: 2, kind: input, shape index: {}]
  %s3 = inlined_call_operand.hbm [shape: f32[2,16,16], index: 3, kind: output, shape index: {0}]
  %s4 = inlined_call_operand.hbm [shape: f32[2,16,16], index: 4, kind: output, shape index: {1}]
  %5 = xla_tuple %s3, %s4
  %s6 = sld [smem:[#allocation0]]
  $region65: #{tpu_custom_call.1} parent=0
    _
  %s8 = ssub.s32 1, %s6
  %s9 = scalar_select 0, %s8, %s6
  $region1: #{tpu_custom_call.1} parent=0
    #allocation2 [shape = 'u8[16384]{0}', space=vmem, size = 0x4000, scoped, tag = 'input window, operand 0']
    #allocation3 [shape = 's32[2]{0}', space=sflag, size = 0x8, scoped, tag = 'scoped memory for tpu_custom_call.1']
    #allocation4 [shape = 's32[2]{0}', space=sflag, size = 0x8, scoped, tag = 'scoped memory for tpu_custom_call.1']
    #allocation5 [shape = 'u8[8192]{0}', space=vmem, size = 0x2000, scoped, tag = 'input window, operand 1, single buffered']
    #allocation6 [shape = 's32[1]{0}', space=sflag, size = 0x4, scoped, tag = 'scoped memory for tpu_custom_call.1']
    #allocation7 [shape = 'u8[8192]{0}', space=vmem, size = 0x2000, scoped, tag = 'input window, operand 2, single buffered']
    #allocation8 [shape = 'u8[16384]{0}', space=vmem, size = 0x4000, scoped, tag = 'output window, operand 0']
    #allocation9 [shape = 'u8[16384]{0}', space=vmem, size = 0x4000, scoped, tag = 'output window, operand 1']
    #allocation10 [shape = 's32[2]{0}', space=sflag, size = 0x8, scoped, tag = 'scoped memory for tpu_custom_call.1']
    %10 = vsyncpa [#allocation3], 0
    %s11 = scalar_lea.sflag [#allocation3], 1
    %12 = vsyncpa %s11, 0
    %13 = vsyncpa [#allocation6], 0
    %14 = vsyncpa [#allocation4], 0
    %s15 = scalar_lea.sflag [#allocation4], 1
    %16 = vsyncpa %s15, 0
    %17 = vsyncpa [#allocation10], 0
    %s18 = scalar_lea.sflag [#allocation10], 1
    %19 = vsyncpa %s18, 0
    loop: start=0, step=1, limit=4
    $region2: #{tpu_custom_call.1} parent=1 // loop_pre_header
      _
    $region3: #{tpu_custom_call.1} parent=1 // loop_header
      %s21 = sphi 0, %s25
      %p22 = scmp.ge.s32.totalorder %s21, 4
      %s31 = sphi 0, %s33
      %s34 = sphi 0, %s31
      %s35 = sphi 0, %s34
      %s51 = sphi 0, %s35
      %s55 = sphi 0, %s55
      %s57 = sphi 0, %s55
      %s58 = sphi 0, %s57
      %s72 = sphi 0, %s58
      %s76 = sphi 0, %s76
      %s78 = sphi 0, %s76
      %s79 = sphi 0, %s78
      %s93 = sphi 0, %s79
      %s99 = sphi 0, %s101
      %s102 = sphi 0, %s99
      %s103 = sphi 0, %s102
      %s119 = sphi 0, %s103
      %s125 = sphi 0, %s127
      %s128 = sphi 0, %s125
      %s129 = sphi 0, %s128
      %s145 = sphi 0, %s129
    $region4: #{tpu_custom_call.1} parent=1 // loop_header_branch
      %24 = sbr.rel (%p22) target = $region8
    $region5: #{tpu_custom_call.1} parent=1 // loop_body
      %s26 = ssub.s32 %s21, 1
      %s27 = ssub.s32 %s21, 2
      %s28 = sadd.s32 %s21, 1
      %s29 = ssub.s32 %s21, %s28
      %p30 = scmp.eq.s32.totalorder %s29, 0
      %s32 = sadd.s32 %s31, 1
      %s33 = scalar_select %p30, %s31, %s32
      %p36 = pneg %p30
      %p37 = scmp.eq.s32.totalorder %s21, 1
      %p38 = por %p36, %p37
      %p39 = scmp.ne.s32.totalorder %s31, %s34
      %p40 = scmp.eq.s32.totalorder %s21, 0
      %p41 = por %p39, %p40
      %p42 = scmp.ne.s32.totalorder %s31, %s34
      %p43 = scmp.eq.s32.totalorder %s26, 1
      %p44 = por %p42, %p43
      %p45 = scmp.ne.s32.totalorder %s34, %s35
      %p46 = scmp.eq.s32.totalorder %s26, 0
      %p47 = por %p45, %p46
      %p48 = scmp.ne.s32.totalorder %s34, %s35
      %p49 = scmp.eq.s32.totalorder %s27, 1
      %p50 = por %p48, %p49
      %p52 = scmp.ne.s32.totalorder %s35, %s51
      %p53 = scmp.eq.s32.totalorder %s27, 0
      %p54 = por %p52, %p53
      %s56 = sadd.s32 %s55, 1
      %p59 = scmp.eq.s32.totalorder %s21, 1
      %p60 = scmp.ne.s32.totalorder %s55, %s57
      %p61 = scmp.eq.s32.totalorder %s21, 0
      %p62 = por %p60, %p61
      %p63 = scmp.ne.s32.totalorder %s55, %s57
      %p64 = scmp.eq.s32.totalorder %s26, 1
      %p65 = por %p63, %p64
      %p66 = scmp.ne.s32.totalorder %s57, %s58
      %p67 = scmp.eq.s32.totalorder %s26, 0
      %p68 = por %p66, %p67
      %p69 = scmp.ne.s32.totalorder %s57, %s58
      %p70 = scmp.eq.s32.totalorder %s27, 1
      %p71 = por %p69, %p70
      %p73 = scmp.ne.s32.totalorder %s58, %s72
      %p74 = scmp.eq.s32.totalorder %s27, 0
      %p75 = por %p73, %p74
      %s77 = sadd.s32 %s76, 1
      %p80 = scmp.eq.s32.totalorder %s21, 1
      %p81 = scmp.ne.s32.totalorder %s76, %s78
      %p82 = scmp.eq.s32.totalorder %s21, 0
      %p83 = por %p81, %p82
      %p84 = scmp.ne.s32.totalorder %s76, %s78
      %p85 = scmp.eq.s32.totalorder %s26, 1
      %p86 = por %p84, %p85
      %p87 = scmp.ne.s32.totalorder %s78, %s79
      %p88 = scmp.eq.s32.totalorder %s26, 0
      %p89 = por %p87, %p88
      %p90 = scmp.ne.s32.totalorder %s78, %s79
      %p91 = scmp.eq.s32.totalorder %s27, 1
      %p92 = por %p90, %p91
      %p94 = scmp.ne.s32.totalorder %s79, %s93
      %p95 = scmp.eq.s32.totalorder %s27, 0
      %p96 = por %p94, %p95
      %s97 = ssub.s32 %s21, %s28
      %p98 = scmp.eq.s32.totalorder %s97, 0
      %s100 = sadd.s32 %s99, 1
      %s101 = scalar_select %p98, %s99, %s100
      %p104 = pneg %p98
      %p105 = scmp.eq.s32.totalorder %s21, 1
      %p106 = por %p104, %p105
      %p107 = scmp.ne.s32.totalorder %s99, %s102
      %p108 = scmp.eq.s32.totalorder %s21, 0
      %p109 = por %p107, %p108
      %p110 = scmp.ne.s32.totalorder %s99, %s102
      %p111 = scmp.eq.s32.totalorder %s26, 1
      %p112 = por %p110, %p111
      %p113 = scmp.ne.s32.totalorder %s102, %s103
      %p114 = scmp.eq.s32.totalorder %s26, 0
      %p115 = por %p113, %p114
      %p116 = scmp.ne.s32.totalorder %s102, %s103
      %p117 = scmp.eq.s32.totalorder %s27, 1
      %p118 = por %p116, %p117
      %p120 = scmp.ne.s32.totalorder %s103, %s119
      %p121 = scmp.eq.s32.totalorder %s27, 0
      %p122 = por %p120, %p121
      %s123 = ssub.s32 %s21, %s28
      %p124 = scmp.eq.s32.totalorder %s123, 0
      %s126 = sadd.s32 %s125, 1
      %s127 = scalar_select %p124, %s125, %s126
      %p130 = pneg %p124
      %p131 = scmp.eq.s32.totalorder %s21, 1
      %p132 = por %p130, %p131
      %p133 = scmp.ne.s32.totalorder %s125, %s128
      %p134 = scmp.eq.s32.totalorder %s21, 0
      %p135 = por %p133, %p134
      %p136 = scmp.ne.s32.totalorder %s125, %s128
      %p137 = scmp.eq.s32.totalorder %s26, 1
      %p138 = por %p136, %p137
      %p139 = scmp.ne.s32.totalorder %s128, %s129
      %p140 = scmp.eq.s32.totalorder %s26, 0
      %p141 = por %p139, %p140
      %p142 = scmp.ne.s32.totalorder %s128, %s129
      %p143 = scmp.eq.s32.totalorder %s27, 1
      %p144 = por %p142, %p143
      %p146 = scmp.ne.s32.totalorder %s129, %s145
      %p147 = scmp.eq.s32.totalorder %s27, 0
      %p148 = por %p146, %p147
      %p149 = scmp.le.s32.totalorder 1, %s21
      %p150 = scmp.lt.s32.totalorder %s21, 3
      %p151 = pnand %p149, %p150
      %p152 = pneg %p151
      // Predicated region
      $region9: #{tpu_custom_call.1} parent=5 // pred_check
        _
      $region10: #{tpu_custom_call.1} parent=5 // pred_check_branch
        %154 = sbr.rel (%p151) target = $region12
      $region11: #{tpu_custom_call.1} parent=5 // pred_region
        %s155 = ssub.s32 %s21, 1
        // Predicated region
        $region13: #{tpu_custom_call.1} parent=11 // pred_check
          %p156 = pneg %p68
        $region14: #{tpu_custom_call.1} parent=11 // pred_check_branch
          %158 = sbr.rel (%p156) target = $region16
        $region15: #{tpu_custom_call.1} parent=11 // pred_region
          %s160 = ssub.s32 256, 256
          %161 = vsyncadd [#allocation6], %s160
          %s162 = sshll.u32 [#allocation5], 4
          %s163 = int_to_ptr.vmem [resolvable:$true] %s162
          %168 = dma.hbm_to_vmem [thread:$0]  %s1, 256, %s163, [#allocation6], 128, 128, 8
        $region16: #{tpu_custom_call.1} parent=11 // pred_fallthru
          _
        // Predicated region
        $region17: #{tpu_custom_call.1} parent=11 // pred_check
          %p169 = pneg %p89
        $region18: #{tpu_custom_call.1} parent=11 // pred_check_branch
          %171 = sbr.rel (%p169) target = $region20
        $region19: #{tpu_custom_call.1} parent=11 // pred_region
          %s173 = ssub.s32 256, 256
          %174 = vsyncadd [#allocation6], %s173
          %s175 = sshll.u32 [#allocation7], 4
          %s176 = int_to_ptr.vmem [resolvable:$true] %s175
          %181 = dma.hbm_to_vmem [thread:$0]  %s2, 256, %s176, [#allocation6], 128, 128, 8
        $region20: #{tpu_custom_call.1} parent=11 // pred_fallthru
          _
      $region12: #{tpu_custom_call.1} parent=5 // pred_fallthru
        _
      %p182 = scmp.lt.s32.totalorder %s21, 2
      // Predicated region
      $region21: #{tpu_custom_call.1} parent=5 // pred_check
        %p183 = pneg %p182
      $region22: #{tpu_custom_call.1} parent=5 // pred_check_branch
        %185 = sbr.rel (%p183) target = $region24
      $region23: #{tpu_custom_call.1} parent=5 // pred_region
        // Predicated region
        $region25: #{tpu_custom_call.1} parent=23 // pred_check
          %p186 = pneg %p41
        $region26: #{tpu_custom_call.1} parent=23 // pred_check_branch
          %188 = sbr.rel (%p186) target = $region28
        $region27: #{tpu_custom_call.1} parent=23 // pred_region
          %s189 = sand.u32 %s31, 1
          %s190 = scalar_lea.sflag [#allocation3], %s189
          %s191 = sand.u32 %s31, 1
          %s192 = smul.addr %s191, 16
          %s193 = scalar_lea.vmem [#allocation2], %s192
          %s195 = ssub.s32 256, 256
          %196 = vsyncadd %s190, %s195
          %s197 = smul.addr %s21, 2
          %s198 = smul.addr %s197, 128
          %s199 = scalar_lea.hbm %s0, %s198
          %s200 = sshll.u32 %s193, 4
          %s201 = int_to_ptr.vmem [resolvable:$true] %s200
          %206 = dma.hbm_to_vmem [thread:$0]  %s199, 256, %s201, %s190, 128, 128, 8
        $region28: #{tpu_custom_call.1} parent=23 // pred_fallthru
          _
      $region24: #{tpu_custom_call.1} parent=5 // pred_fallthru
        _
      %p207 = scmp.le.s32.totalorder 1, %s21
      %p208 = scmp.lt.s32.totalorder %s21, 3
      %p209 = pnand %p207, %p208
      %p210 = pneg %p209
      // Predicated region
      $region29: #{tpu_custom_call.1} parent=5 // pred_check
        _
      $region30: #{tpu_custom_call.1} parent=5 // pred_check_branch
        %212 = sbr.rel (%p209) target = $region32
      $region31: #{tpu_custom_call.1} parent=5 // pred_region
        %s213 = ssub.s32 %s21, 1
        %s214 = sand.u32 %s34, 1
        %s215 = scalar_lea.sflag [#allocation3], %s214
        %s216 = sand.u32 %s34, 1
        %s217 = smul.addr %s216, 16
        %s218 = scalar_lea.vmem [#allocation2], %s217
        // Predicated region
        $region33: #{tpu_custom_call.1} parent=31 // pred_check
          %p219 = pneg %p47
        $region34: #{tpu_custom_call.1} parent=31 // pred_check_branch
          %221 = sbr.rel (%p219) target = $region36
        $region35: #{tpu_custom_call.1} parent=31 // pred_region
          %222 = dma.done %s215, 256
        $region36: #{tpu_custom_call.1} parent=31 // pred_fallthru
          _
        // Predicated region
        $region37: #{tpu_custom_call.1} parent=31 // pred_check
          %p223 = pneg %p68
        $region38: #{tpu_custom_call.1} parent=31 // pred_check_branch
          %225 = sbr.rel (%p223) target = $region40
        $region39: #{tpu_custom_call.1} parent=31 // pred_region
          %226 = dma.done [#allocation6], 256
        $region40: #{tpu_custom_call.1} parent=31 // pred_fallthru
          _
        // Predicated region
        $region41: #{tpu_custom_call.1} parent=31 // pred_check
          %p227 = pneg %p89
        $region42: #{tpu_custom_call.1} parent=31 // pred_check_branch
          %229 = sbr.rel (%p227) target = $region44
        $region43: #{tpu_custom_call.1} parent=31 // pred_region
          %230 = dma.done [#allocation6], 256
        $region44: #{tpu_custom_call.1} parent=31 // pred_fallthru
          _
        %s231 = sand.u32 %s34, 1
        %s232 = scalar_lea.sflag [#allocation3], %s231
        %s233 = sand.u32 %s34, 1
        %s234 = smul.addr %s233, 16
        %s235 = scalar_lea.vmem [#allocation2], %s234
        %p236 = pneg %p47
        %p237 = pneg %p44
        %p238 = pneg %p68
        %p239 = pneg %p65
        %p240 = pneg %p89
        %p241 = pneg %p86
        %p242 = pneg %p115
        %p243 = pneg %p112
        %s244 = sand.u32 %s102, 1
        %s245 = scalar_lea.sflag [#allocation4], %s244
        %s246 = sand.u32 %s102, 1
        %s247 = smul.addr %s246, 16
        %s248 = scalar_lea.vmem [#allocation8], %s247
        %p249 = pneg %p141
        %p250 = pneg %p138
        %s251 = sand.u32 %s128, 1
        %s252 = scalar_lea.sflag [#allocation10], %s251
        %s253 = sand.u32 %s128, 1
        %s254 = smul.addr %s253, 16
        %s255 = scalar_lea.vmem [#allocation9], %s254
        %v256 = vld [vmem:[%s218] sm:$0xff]
        %v257 = vld [vmem:[%s218 + $0x8] sm:$0xff]
        %v258 = vld [vmem:[#allocation5] sm:$0xff]
        %v259 = vld [vmem:[#allocation5 + $0x8] sm:$0xff]
        %v260 = vld [vmem:[#allocation7] sm:$0xff]
        %v261 = vld [vmem:[#allocation7 + $0x8] sm:$0xff]
        %vm262 = vcmask 130048
        %v264 = vsel %vm262, %v256, 0
        %v267 = vsel %vm262, %v257, 0
        %269 = vmatprep.subr.mxu0 0.0
        %270 = vmatpush1.msra.mxu0 %v260
        %271 = vmatprep.subr.mxu0 0.0
        %272 = vmatpush1.msra.mxu0 %v261
        %273 = vmatprep.subr.mxu0 0.0
        %274 = vmatpush1.msra.mxu0 0.0
        %275 = vmatprep.subr.mxu0 0.0
        %276 = vmatpush1.msra.mxu0 0.0
        %277 = vmatprep.subr.mxu0 0.0
        %278 = vmatpush1.msra.mxu0 0.0
        %279 = vmatprep.subr.mxu0 0.0
        %280 = vmatpush1.msra.mxu0 0.0
        %281 = vmatprep.subr.mxu0 0.0
        %282 = vmatpush1.msra.mxu0 0.0
        %283 = vmatprep.subr.mxu0 0.0
        %284 = vmatpush1.msra.mxu0 0.0
        %285 = vmatprep.subr.mxu0 0.0
        %286 = vmatpush1.msra.mxu0 0.0
        %287 = vmatprep.subr.mxu0 0.0
        %288 = vmatpush1.msra.mxu0 0.0
        %289 = vmatprep.subr.mxu0 0.0
        %290 = vmatpush1.msra.mxu0 0.0
        %291 = vmatprep.subr.mxu0 0.0
        %292 = vmatpush1.msra.mxu0 0.0
        %293 = vmatprep.subr.mxu0 0.0
        %294 = vmatpush1.msra.mxu0 0.0
        %295 = vmatprep.subr.mxu0 0.0
        %296 = vmatpush1.msra.mxu0 0.0
        %297 = vmatprep.subr.mxu0 0.0
        %298 = vmatpush1.msra.mxu0 0.0
        %299 = vmatprep.subr.mxu0 0.0
        %300 = vmatpush1.msra.mxu0 0.0
        %301 = vmatprep.subr.mxu0 0.0
        %302 = vmatpush1.msra.mxu0 0.0
        %303 = vmatprep.subr.mxu0 0.0
        %304 = vmatpush1.msra.mxu0 0.0
        %305 = vmatprep.subr.mxu0 0.0
        %306 = vmatpush1.msra.mxu0 0.0
        %307 = vmatprep.subr.mxu0 0.0
        %308 = vmatpush1.msra.mxu0 0.0
        %309 = vmatprep.subr.mxu0 0.0
        %310 = vmatpush1.msra.mxu0 0.0
        %311 = vmatprep.subr.mxu0 0.0
        %312 = vmatpush1.msra.mxu0 0.0
        %313 = vmatprep.subr.mxu0 0.0
        %314 = vmatpush1.msra.mxu0 0.0
        %315 = vmatprep.subr.mxu0 0.0
        %316 = vmatpush1.msra.mxu0 0.0
        %317 = vmatprep.subr.mxu0 0.0
        %318 = vmatpush1.msra.mxu0 0.0
        %319 = vmatprep.subr.mxu0 0.0
        %320 = vmatpush1.msra.mxu0 0.0
        %321 = vmatprep.subr.mxu0 0.0
        %322 = vmatpush1.msra.mxu0 0.0
        %323 = vmatprep.subr.mxu0 0.0
        %324 = vmatpush1.msra.mxu0 0.0
        %325 = vmatprep.subr.mxu0 0.0
        %326 = vmatpush1.msra.mxu0 0.0
        %327 = vmatprep.subr.mxu0 0.0
        %328 = vmatpush1.msra.mxu0 0.0
        %329 = vmatprep.subr.mxu0 0.0
        %330 = vmatpush1.msra.mxu0 0.0
        %331 = vmatprep.subr.mxu0 0.0
        %332 = vmatpush1.msra.mxu0 0.0
        %333 = vmatprep.mubr.f32.mxu0 0.0
        %334 = vmatmul.mubr.f32.gmra.mrb[0].mxu0 %v264
        %v335 = vpop.f32.mrb[0].mxu0
        %v336 = vadd.f32 0.0, %v335
        %v337 = vpop.f32.mrb[0].mxu0
        %338 = vmatprep.mubr.f32.mxu0 0.0
        %339 = vmatmul.mubr.f32.gmra.mrb[0].mxu0 %v267
        %v340 = vpop.f32.mrb[0].mxu0
        %v341 = vadd.f32 0.0, %v340
        %v342 = vpop.f32.mrb[0].mxu0
        %343 = vdwg.mxu0
        %v345 = vsel %vm262, %v258, 0
        %v348 = vsel %vm262, %v259, 0
        %350 = vmatprep.subr.mxu0 0.0
        %351 = vmatpush1.msra.mxu0 %v336
        %352 = vmatprep.subr.mxu0 0.0
        %353 = vmatpush1.msra.mxu0 %v341
        %354 = vmatprep.subr.mxu0 0.0
        %355 = vmatpush1.msra.mxu0 0.0
        %356 = vmatprep.subr.mxu0 0.0
        %357 = vmatpush1.msra.mxu0 0.0
        %358 = vmatprep.subr.mxu0 0.0
        %359 = vmatpush1.msra.mxu0 0.0
        %360 = vmatprep.subr.mxu0 0.0
        %361 = vmatpush1.msra.mxu0 0.0
        %362 = vmatprep.subr.mxu0 0.0
        %363 = vmatpush1.msra.mxu0 0.0
        %364 = vmatprep.subr.mxu0 0.0
        %365 = vmatpush1.msra.mxu0 0.0
        %366 = vmatprep.subr.mxu0 0.0
        %367 = vmatpush1.msra.mxu0 0.0
        %368 = vmatprep.subr.mxu0 0.0
        %369 = vmatpush1.msra.mxu0 0.0
        %370 = vmatprep.subr.mxu0 0.0
        %371 = vmatpush1.msra.mxu0 0.0
        %372 = vmatprep.subr.mxu0 0.0
        %373 = vmatpush1.msra.mxu0 0.0
        %374 = vmatprep.subr.mxu0 0.0
        %375 = vmatpush1.msra.mxu0 0.0
        %376 = vmatprep.subr.mxu0 0.0
        %377 = vmatpush1.msra.mxu0 0.0
        %378 = vmatprep.subr.mxu0 0.0
        %379 = vmatpush1.msra.mxu0 0.0
        %380 = vmatprep.subr.mxu0 0.0
        %381 = vmatpush1.msra.mxu0 0.0
        %382 = vmatprep.subr.mxu0 0.0
        %383 = vmatpush1.msra.mxu0 0.0
        %384 = vmatprep.subr.mxu0 0.0
        %385 = vmatpush1.msra.mxu0 0.0
        %386 = vmatprep.subr.mxu0 0.0
        %387 = vmatpush1.msra.mxu0 0.0
        %388 = vmatprep.subr.mxu0 0.0
        %389 = vmatpush1.msra.mxu0 0.0
        %390 = vmatprep.subr.mxu0 0.0
        %391 = vmatpush1.msra.mxu0 0.0
        %392 = vmatprep.subr.mxu0 0.0
        %393 = vmatpush1.msra.mxu0 0.0
        %394 = vmatprep.subr.mxu0 0.0
        %395 = vmatpush1.msra.mxu0 0.0
        %396 = vmatprep.subr.mxu0 0.0
        %397 = vmatpush1.msra.mxu0 0.0
        %398 = vmatprep.subr.mxu0 0.0
        %399 = vmatpush1.msra.mxu0 0.0
        %400 = vmatprep.subr.mxu0 0.0
        %401 = vmatpush1.msra.mxu0 0.0
        %402 = vmatprep.subr.mxu0 0.0
        %403 = vmatpush1.msra.mxu0 0.0
        %404 = vmatprep.subr.mxu0 0.0
        %405 = vmatpush1.msra.mxu0 0.0
        %406 = vmatprep.subr.mxu0 0.0
        %407 = vmatpush1.msra.mxu0 0.0
        %408 = vmatprep.subr.mxu0 0.0
        %409 = vmatpush1.msra.mxu0 0.0
        %410 = vmatprep.subr.mxu0 0.0
        %411 = vmatpush1.msra.mxu0 0.0
        %412 = vmatprep.subr.mxu0 0.0
        %413 = vmatpush1.msra.mxu0 0.0
        %414 = vmatprep.mubr.f32.mxu0 0.0
        %415 = vmatmul.mubr.f32.gmra.mrb[0].mxu0 %v345
        %v416 = vpop.f32.mrb[0].mxu0
        %v417 = vadd.f32 0.0, %v416
        %v418 = vpop.f32.mrb[0].mxu0
        %419 = vmatprep.mubr.f32.mxu0 0.0
        %420 = vmatmul.mubr.f32.gmra.mrb[0].mxu0 %v348
        %v421 = vpop.f32.mrb[0].mxu0
        %v422 = vadd.f32 0.0, %v421
        %v423 = vpop.f32.mrb[0].mxu0
        %424 = vdwg.mxu0
        %v425 = vmul.f32 %v417, 0.04
        %v426 = vmul.f32 %v422, 0.04
        %v427 = vsub.f32 %v256, %v425
        %v428 = vsub.f32 %v257, %v426
        %v429 = vmul.f32 %v427, %v427
        %v430 = vmul.f32 %v428, %v428
        %v432 = vsel %vm262, %v429, 0
        %v435 = vsel %vm262, %v430, 0
        %437 = vmatprep.subr.mxu0 0.0
        %438 = vmatpush1.msra.mxu0 %v260
        %439 = vmatprep.subr.mxu0 0.0
        %440 = vmatpush1.msra.mxu0 %v261
        %441 = vmatprep.subr.mxu0 0.0
        %442 = vmatpush1.msra.mxu0 0.0
        %443 = vmatprep.subr.mxu0 0.0
        %444 = vmatpush1.msra.mxu0 0.0
        %445 = vmatprep.subr.mxu0 0.0
        %446 = vmatpush1.msra.mxu0 0.0
        %447 = vmatprep.subr.mxu0 0.0
        %448 = vmatpush1.msra.mxu0 0.0
        %449 = vmatprep.subr.mxu0 0.0
        %450 = vmatpush1.msra.mxu0 0.0
        %451 = vmatprep.subr.mxu0 0.0
        %452 = vmatpush1.msra.mxu0 0.0
        %453 = vmatprep.subr.mxu0 0.0
        %454 = vmatpush1.msra.mxu0 0.0
        %455 = vmatprep.subr.mxu0 0.0
        %456 = vmatpush1.msra.mxu0 0.0
        %457 = vmatprep.subr.mxu0 0.0
        %458 = vmatpush1.msra.mxu0 0.0
        %459 = vmatprep.subr.mxu0 0.0
        %460 = vmatpush1.msra.mxu0 0.0
        %461 = vmatprep.subr.mxu0 0.0
        %462 = vmatpush1.msra.mxu0 0.0
        %463 = vmatprep.subr.mxu0 0.0
        %464 = vmatpush1.msra.mxu0 0.0
        %465 = vmatprep.subr.mxu0 0.0
        %466 = vmatpush1.msra.mxu0 0.0
        %467 = vmatprep.subr.mxu0 0.0
        %468 = vmatpush1.msra.mxu0 0.0
        %469 = vmatprep.subr.mxu0 0.0
        %470 = vmatpush1.msra.mxu0 0.0
        %471 = vmatprep.subr.mxu0 0.0
        %472 = vmatpush1.msra.mxu0 0.0
        %473 = vmatprep.subr.mxu0 0.0
        %474 = vmatpush1.msra.mxu0 0.0
        %475 = vmatprep.subr.mxu0 0.0
        %476 = vmatpush1.msra.mxu0 0.0
        %477 = vmatprep.subr.mxu0 0.0
        %478 = vmatpush1.msra.mxu0 0.0
        %479 = vmatprep.subr.mxu0 0.0
        %480 = vmatpush1.msra.mxu0 0.0
        %481 = vmatprep.subr.mxu0 0.0
        %482 = vmatpush1.msra.mxu0 0.0
        %483 = vmatprep.subr.mxu0 0.0
        %484 = vmatpush1.msra.mxu0 0.0
        %485 = vmatprep.subr.mxu0 0.0
        %486 = vmatpush1.msra.mxu0 0.0
        %487 = vmatprep.subr.mxu0 0.0
        %488 = vmatpush1.msra.mxu0 0.0
        %489 = vmatprep.subr.mxu0 0.0
        %490 = vmatpush1.msra.mxu0 0.0
        %491 = vmatprep.subr.mxu0 0.0
        %492 = vmatpush1.msra.mxu0 0.0
        %493 = vmatprep.subr.mxu0 0.0
        %494 = vmatpush1.msra.mxu0 0.0
        %495 = vmatprep.subr.mxu0 0.0
        %496 = vmatpush1.msra.mxu0 0.0
        %497 = vmatprep.subr.mxu0 0.0
        %498 = vmatpush1.msra.mxu0 0.0
        %499 = vmatprep.subr.mxu0 0.0
        %500 = vmatpush1.msra.mxu0 0.0
        %501 = vmatprep.mubr.f32.mxu0 0.0
        %502 = vmatmul.mubr.f32.gmra.mrb[0].mxu0 %v432
        %v503 = vpop.f32.mrb[0].mxu0
        %v504 = vadd.f32 0.0, %v503
        %v505 = vpop.f32.mrb[0].mxu0
        %506 = vmatprep.mubr.f32.mxu0 0.0
        %507 = vmatmul.mubr.f32.gmra.mrb[0].mxu0 %v435
        %v508 = vpop.f32.mrb[0].mxu0
        %v509 = vadd.f32 0.0, %v508
        %v510 = vpop.f32.mrb[0].mxu0
        %511 = vdwg.mxu0
        %512 = vmatprep.subr.mxu0 0.0
        %513 = vmatpush1.msra.mxu0 %v504
        %514 = vmatprep.subr.mxu0 0.0
        %515 = vmatpush1.msra.mxu0 %v509
        %516 = vmatprep.subr.mxu0 0.0
        %517 = vmatpush1.msra.mxu0 0.0
        %518 = vmatprep.subr.mxu0 0.0
        %519 = vmatpush1.msra.mxu0 0.0
        %520 = vmatprep.subr.mxu0 0.0
        %521 = vmatpush1.msra.mxu0 0.0
        %522 = vmatprep.subr.mxu0 0.0
        %523 = vmatpush1.msra.mxu0 0.0
        %524 = vmatprep.subr.mxu0 0.0
        %525 = vmatpush1.msra.mxu0 0.0
        %526 = vmatprep.subr.mxu0 0.0
        %527 = vmatpush1.msra.mxu0 0.0
        %528 = vmatprep.subr.mxu0 0.0
        %529 = vmatpush1.msra.mxu0 0.0
        %530 = vmatprep.subr.mxu0 0.0
        %531 = vmatpush1.msra.mxu0 0.0
        %532 = vmatprep.subr.mxu0 0.0
        %533 = vmatpush1.msra.mxu0 0.0
        %534 = vmatprep.subr.mxu0 0.0
        %535 = vmatpush1.msra.mxu0 0.0
        %536 = vmatprep.subr.mxu0 0.0
        %537 = vmatpush1.msra.mxu0 0.0
        %538 = vmatprep.subr.mxu0 0.0
        %539 = vmatpush1.msra.mxu0 0.0
        %540 = vmatprep.subr.mxu0 0.0
        %541 = vmatpush1.msra.mxu0 0.0
        %542 = vmatprep.subr.mxu0 0.0
        %543 = vmatpush1.msra.mxu0 0.0
        %544 = vmatprep.subr.mxu0 0.0
        %545 = vmatpush1.msra.mxu0 0.0
        %546 = vmatprep.subr.mxu0 0.0
        %547 = vmatpush1.msra.mxu0 0.0
        %548 = vmatprep.subr.mxu0 0.0
        %549 = vmatpush1.msra.mxu0 0.0
        %550 = vmatprep.subr.mxu0 0.0
        %551 = vmatpush1.msra.mxu0 0.0
        %552 = vmatprep.subr.mxu0 0.0
        %553 = vmatpush1.msra.mxu0 0.0
        %554 = vmatprep.subr.mxu0 0.0
        %555 = vmatpush1.msra.mxu0 0.0
        %556 = vmatprep.subr.mxu0 0.0
        %557 = vmatpush1.msra.mxu0 0.0
        %558 = vmatprep.subr.mxu0 0.0
        %559 = vmatpush1.msra.mxu0 0.0
        %560 = vmatprep.subr.mxu0 0.0
        %561 = vmatpush1.msra.mxu0 0.0
        %562 = vmatprep.subr.mxu0 0.0
        %563 = vmatpush1.msra.mxu0 0.0
        %564 = vmatprep.subr.mxu0 0.0
        %565 = vmatpush1.msra.mxu0 0.0
        %566 = vmatprep.subr.mxu0 0.0
        %567 = vmatpush1.msra.mxu0 0.0
        %568 = vmatprep.subr.mxu0 0.0
        %569 = vmatpush1.msra.mxu0 0.0
        %570 = vmatprep.subr.mxu0 0.0
        %571 = vmatpush1.msra.mxu0 0.0
        %572 = vmatprep.subr.mxu0 0.0
        %573 = vmatpush1.msra.mxu0 0.0
        %574 = vmatprep.subr.mxu0 0.0
        %575 = vmatpush1.msra.mxu0 0.0
        %576 = vmatprep.mubr.f32.mxu0 0.0
        %577 = vmatmul.mubr.f32.gmra.mrb[0].mxu0 %v345
        %v578 = vpop.f32.mrb[0].mxu0
        %v579 = vadd.f32 0.0, %v578
        %v580 = vpop.f32.mrb[0].mxu0
        %581 = vmatprep.mubr.f32.mxu0 0.0
        %582 = vmatmul.mubr.f32.gmra.mrb[0].mxu0 %v348
        %v583 = vpop.f32.mrb[0].mxu0
        %v584 = vadd.f32 0.0, %v583
        %v585 = vpop.f32.mrb[0].mxu0
        %586 = vdwg.mxu0
        %v587 = vmul.f32 %v579, 0.04
        %v588 = vmul.f32 %v584, 0.04
        %v589 = vrsqrt.pop %v587
        %v590 = vmul.f32 %v587, %v589
        %vm591 = vcmp.eq.f32.partialorder %v587, inf
        %v592 = vsel %vm591, %v587, %v590
        %vm593 = vcmp.eq.f32.partialorder %v587, 0.0
        %v594 = vand.u32 %v587, 2147483648
        %v595 = vsel %vm593, %v594, %v592
        %v596 = vrsqrt.pop %v588
        %v597 = vmul.f32 %v588, %v596
        %vm598 = vcmp.eq.f32.partialorder %v588, inf
        %v599 = vsel %vm598, %v588, %v597
        %vm600 = vcmp.eq.f32.partialorder %v588, 0.0
        %v601 = vand.u32 %v588, 2147483648
        %v602 = vsel %vm600, %v601, %v599
        %v603 = vadd.f32 %v595, 1e-06
        %v604 = vadd.f32 %v602, 1e-06
        %v605 = vrcp.pop %v603
        %v606 = vmul.f32 %v427, %v605
        %v607 = vrcp.pop %v604
        %v608 = vmul.f32 %v428, %v607
        %609 = vst.msk [vmem:[%s248] sm:$0xff] %vm262, %v606
        %610 = vst.msk [vmem:[%s248 + $0x8] sm:$0xff] %vm262, %v608
        %611 = vst.msk [vmem:[%s255] sm:$0xff] %vm262, %v595
        %612 = vst.msk [vmem:[%s255 + $0x8] sm:$0xff] %vm262, %v602
        %s613 = sand.u32 %s102, 1
        %s614 = scalar_lea.sflag [#allocation4], %s613
        %s615 = sand.u32 %s102, 1
        %s616 = smul.addr %s615, 16
        %s617 = scalar_lea.vmem [#allocation8], %s616
        %s618 = sand.u32 %s128, 1
        %s619 = scalar_lea.sflag [#allocation10], %s618
        %s620 = sand.u32 %s128, 1
        %s621 = smul.addr %s620, 16
        %s622 = scalar_lea.vmem [#allocation9], %s621
        // Predicated region
        $region45: #{tpu_custom_call.1} parent=31 // pred_check
          %p623 = pneg %p112
        $region46: #{tpu_custom_call.1} parent=31 // pred_check_branch
          %625 = sbr.rel (%p623) target = $region48
        $region47: #{tpu_custom_call.1} parent=31 // pred_region
          %s627 = ssub.s32 256, 256
          %628 = vsyncadd %s614, %s627
          %s629 = smul.addr %s26, 2
          %s630 = smul.addr %s629, 128
          %s631 = scalar_lea.hbm %s3, %s630
          %s632 = sshll.u32 %s617, 4
          %s633 = int_to_ptr.vmem [resolvable:$true] %s632
          %638 = dma.vmem_to_hbm [thread:$0]  %s633, 256, %s631, %s614, 128, 128, 8
        $region48: #{tpu_custom_call.1} parent=31 // pred_fallthru
          _
        // Predicated region
        $region49: #{tpu_custom_call.1} parent=31 // pred_check
          %p639 = pneg %p138
        $region50: #{tpu_custom_call.1} parent=31 // pred_check_branch
          %641 = sbr.rel (%p639) target = $region52
        $region51: #{tpu_custom_call.1} parent=31 // pred_region
          %s643 = ssub.s32 256, 256
          %644 = vsyncadd %s619, %s643
          %s645 = smul.addr %s26, 2
          %s646 = smul.addr %s645, 128
          %s647 = scalar_lea.hbm %s4, %s646
          %s648 = sshll.u32 %s622, 4
          %s649 = int_to_ptr.vmem [resolvable:$true] %s648
          %654 = dma.vmem_to_hbm [thread:$0]  %s649, 256, %s647, %s619, 128, 128, 8
        $region52: #{tpu_custom_call.1} parent=31 // pred_fallthru
          _
      $region32: #{tpu_custom_call.1} parent=5 // pred_fallthru
        _
      %p655 = scmp.le.s32.totalorder 2, %s21
      // Predicated region
      $region53: #{tpu_custom_call.1} parent=5 // pred_check
        %p656 = pneg %p655
      $region54: #{tpu_custom_call.1} parent=5 // pred_check_branch
        %658 = sbr.rel (%p656) target = $region56
      $region55: #{tpu_custom_call.1} parent=5 // pred_region
        %s659 = ssub.s32 %s21, 2
        // Predicated region
        $region57: #{tpu_custom_call.1} parent=55 // pred_check
          %p660 = pneg %p118
        $region58: #{tpu_custom_call.1} parent=55 // pred_check_branch
          %662 = sbr.rel (%p660) target = $region60
        $region59: #{tpu_custom_call.1} parent=55 // pred_region
          %s663 = sand.u32 %s103, 1
          %s664 = scalar_lea.sflag [#allocation4], %s663
          %s665 = sand.u32 %s103, 1
          %s666 = smul.addr %s665, 16
          %s667 = scalar_lea.vmem [#allocation8], %s666
          %668 = dma.done %s664, 256
        $region60: #{tpu_custom_call.1} parent=55 // pred_fallthru
          _
        // Predicated region
        $region61: #{tpu_custom_call.1} parent=55 // pred_check
          %p669 = pneg %p144
        $region62: #{tpu_custom_call.1} parent=55 // pred_check_branch
          %671 = sbr.rel (%p669) target = $region64
        $region63: #{tpu_custom_call.1} parent=55 // pred_region
          %s672 = sand.u32 %s129, 1
          %s673 = scalar_lea.sflag [#allocation10], %s672
          %s674 = sand.u32 %s129, 1
          %s675 = smul.addr %s674, 16
          %s676 = scalar_lea.vmem [#allocation9], %s675
          %677 = dma.done %s673, 256
        $region64: #{tpu_custom_call.1} parent=55 // pred_fallthru
          _
      $region56: #{tpu_custom_call.1} parent=5 // pred_fallthru
        _
    $region6: #{tpu_custom_call.1} parent=1 // loop_footer
      %s25 = sadd.s32 1, %s21
    $region7: #{tpu_custom_call.1} parent=1 // loop_footer_branch
      %20 = sbr.rel target = $region3
    $region8: #{tpu_custom_call.1} parent=1 // loop_exit
      _
    %678 = vsyncpa [#allocation3], 1
    %s679 = scalar_lea.sflag [#allocation3], 1
    %680 = vsyncpa %s679, 1
    %681 = vsyncpa [#allocation6], 1
    %682 = vsyncpa [#allocation4], 1
    %s683 = scalar_lea.sflag [#allocation4], 1
    %684 = vsyncpa %s683, 1
    %685 = vsyncpa [#allocation10], 1
    %s686 = scalar_lea.sflag [#allocation10], 1
    %687 = vsyncpa %s686, 1

</llo_original>
